<compile_context>
chip_gen: v7x
topology: tpu7x:2x2x1
jax: 0.10.0
libtpu: 0.0.40
codegen_flags: <defaults>
</compile_context>

<pallas_src>
import functools

import jax
import jax.numpy as jnp
from jax.experimental import pallas as pl
from jax.experimental.pallas import tpu as pltpu


# ----------------------------------------------------------------------------
# Tile selection
# ----------------------------------------------------------------------------
_BLOCK_BUDGET_BYTES = 6 << 20  # per input block; x2 double-buffered ~= 12 MiB


def _round_up(v, m):
    return (v + m - 1) // m * m


def _pick_tiles(nc, hw, itemsize):
    """Choose (rows_per_block, hw_chunk) for the (N*C, H*W) reduction."""
    # Sublane packing granularity per dtype width.
    sub = 8 if itemsize >= 4 else (16 if itemsize == 2 else 32)
    row_cap = min(_round_up(nc, sub), 1024)

    # Split H*W only into chunks that divide it exactly (keeps the reduction
    # mask-free); shrink until even a minimal `sub`-row block fits the budget.
    hw_chunk = hw
    while (hw_chunk % 2 == 0 and hw_chunk > 512
           and (hw_chunk // 2) % 128 == 0
           and sub * hw_chunk * itemsize > _BLOCK_BUDGET_BYTES):
        hw_chunk //= 2

    tr = (_BLOCK_BUDGET_BYTES // (hw_chunk * itemsize)) // sub * sub
    tr = max(sub, min(row_cap, tr))
    return tr, hw_chunk


# ----------------------------------------------------------------------------
# Pallas kernel: per-row global average pooling + LeakyReLU(0.01)
# ----------------------------------------------------------------------------
def _gap_lrelu_kernel(x_ref, o_ref, acc_ref, *, inv_hw):
    # x_ref: (TR, HW_CHUNK) tile of the (N*C, H*W) matrix.
    k = pl.program_id(1)

    @pl.when(k == 0)
    def _init():
        acc_ref[...] = jnp.zeros_like(acc_ref)

    # Accumulate partial row-sums in f32 (input may be bf16 etc.).
    x = x_ref[...].astype(jnp.float32)
    acc_ref[...] += jnp.sum(x, axis=1, keepdims=True)

    @pl.when(k == pl.num_programs(1) - 1)
    def _finalize():
        m = acc_ref[...] * inv_hw                      # mean over H*W
        r = jnp.where(m >= 0.0, m, 0.01 * m)           # LeakyReLU(0.01)
        o_ref[...] = r.astype(o_ref.dtype)


def global_avg_pool_lrelu(x_nchw, *, tr=None, hw_chunk=None):
    """x: (N, C, H, W) -> (N, C): spatial mean followed by LeakyReLU(0.01)."""
    n, c, h, w = x_nchw.shape
    nc, hw = n * c, h * w
    x2d = x_nchw.reshape(nc, hw)                       # free reshape, native dtype
    itemsize = jnp.dtype(x2d.dtype).itemsize

    auto_tr, auto_hw_chunk = _pick_tiles(nc, hw, itemsize)
    tr = auto_tr if tr is None else tr
    hw_chunk = auto_hw_chunk if hw_chunk is None else hw_chunk
    assert hw % hw_chunk == 0, "hw_chunk must divide H*W exactly"

    grid = (pl.cdiv(nc, tr), hw // hw_chunk)           # rows parallel, HW reduce

    # Raise scoped VMEM only if the (pathological) block footprint needs it.
    block_bytes = tr * hw_chunk * itemsize
    cp_kwargs = dict(dimension_semantics=("parallel", "arbitrary"))
    if 2 * block_bytes > (12 << 20):
        cp_kwargs["vmem_limit_bytes"] = 2 * block_bytes + (4 << 20)

    out = pl.pallas_call(
        functools.partial(_gap_lrelu_kernel, inv_hw=1.0 / float(hw)),
        out_shape=jax.ShapeDtypeStruct((nc, 1), x2d.dtype),
        grid_spec=pltpu.PrefetchScalarGridSpec(
            num_scalar_prefetch=0,
            grid=grid,
            in_specs=[pl.BlockSpec((tr, hw_chunk), lambda i, k: (i, k))],
            out_specs=pl.BlockSpec((tr, 1), lambda i, k: (i, 0)),
            scratch_shapes=[pltpu.VMEM((tr, 1), jnp.float32)],
        ),
        compiler_params=pltpu.CompilerParams(**cp_kwargs),
    )(x2d)

    return out[:, 0].reshape(n, c)


# ----------------------------------------------------------------------------
# Generate_Info (JAX / Pallas version)
# ----------------------------------------------------------------------------
class GenerateInfo:
    def __init__(self, inc, outc, out_seq, kernel_size=3, padding=0,
                 dilation=1, stride=1, modulation=False, group_modulation=False,
                 split_modulation=False, channelwise=False, recombine='multiply',
                 repeat_concat=False, mean_dim=None, global_info=False,
                 bias=None):
        self.kernel_size = kernel_size
        self.padding = padding
        self.stride = stride
        self.dilation = dilation
        self.in_channel_group = inc
        self.in_channel = sum(inc)
        self.out_channel = outc
        self.out_seq = out_seq
        self.in_group_num = len(inc)
        self.out_group_num = len(out_seq)
        self.cat_num = mean_dim
        self.modulation = modulation
        self.group_modulation = group_modulation
        self.split_modulation = split_modulation
        self.channelwise = channelwise
        self.global_info = global_info
        self.recombine = recombine
        self.repeat_concat = repeat_concat

        in_group_accmulate = [0]
        self.groups = []
        for i in range(self.in_group_num):
            in_group_accmulate.append(sum(self.in_channel_group[:i + 1]))
        for index, i in enumerate(out_seq):
            indexes = list(map(
                lambda x: [in_group_accmulate[x], in_group_accmulate[x + 1]], i))
            self.groups.append(indexes)
        # No learnable parameters in __init__ (only LeakyReLU); nothing to init.
        # TODO(synk): _set_lr is a backward-hook (gradient scaling); forward-only
        # here, so it has no equivalent.

    def __call__(self, x):
        if self.global_info == 'all':
            return self._forward(x)
        return self._part_forward(x)

    def _forward(self, x):
        # 'all' case: global info over the full channel set.
        pooled = global_avg_pool_lrelu(x)                     # (N, C)
        return pooled[:, :, None, None]                       # (N, C, 1, 1)

    def _part_forward(self, x):
        # Per-output-group global info.
        pooled = global_avg_pool_lrelu(x)                     # (N, C)
        infos = []
        for group in self.groups:
            parts = [pooled[:, s:e] for (s, e) in group]      # channel slices
            g = jnp.concatenate(parts, axis=1)                # (N, C_g)
            infos.append(g[:, :, None, None])                 # (N, C_g, 1, 1)
        return infos


# ----------------------------------------------------------------------------
# Self-test
# ----------------------------------------------------------------------------
def _reference_groups(x, module):
    pooled = jnp.mean(x.astype(jnp.float32), axis=(2, 3))
    pooled = jnp.where(pooled >= 0.0, pooled, 0.01 * pooled)
    outs = []
    for group in module.groups:
        parts = [pooled[:, s:e] for (s, e) in group]
        outs.append(jnp.concatenate(parts, axis=1)[:, :, None, None])
    return outs


if __name__ == "__main__":
    k1, k2 = jax.random.split(jax.random.PRNGKey(0))

    # ---- Case 1: module-level check (small shapes, single block) ----
    N, H, W = 2, 16, 16
    inc = [2, 2]             # two input channel groups of 2 channels each
    out_seq = [[0], [0, 1]]  # group 0 uses [0:2]; group 1 uses [0:2]+[2:4]
    C = sum(inc)
    x = jax.random.normal(k1, (N, C, H, W), dtype=jnp.float32)

    mod = GenerateInfo(inc=inc, outc=4, out_seq=out_seq, global_info='part')
    outs = [jax.block_until_ready(o) for o in mod(x)]
    refs = _reference_groups(x, mod)
    for o, r in zip(outs, refs):
        assert o.shape == r.shape, (o.shape, r.shape)
        assert jnp.allclose(o, r, atol=1e-5, rtol=1e-5), "part mismatch"

    # 'all' dispatch path.
    mod_all = GenerateInfo(inc=inc, outc=4, out_seq=out_seq, global_info='all')
    o_all = jax.block_until_ready(mod_all(x))
    r_all = jnp.mean(x, axis=(2, 3))
    r_all = jnp.where(r_all >= 0.0, r_all, 0.01 * r_all)[:, :, None, None]
    assert o_all.shape == r_all.shape
    assert jnp.allclose(o_all, r_all, atol=1e-5, rtol=1e-5), "all mismatch"

    # ---- Case 2: force a multi-block grid (2 row blocks x 2 HW chunks) to
    # exercise the accumulator init/finalize (pl.when) path. ----
    x2 = jax.random.normal(k2, (2, 8, 16, 16), dtype=jnp.float32)
    p2 = jax.block_until_ready(global_avg_pool_lrelu(x2, tr=8, hw_chunk=128))
    r2 = jnp.mean(x2, axis=(2, 3))
    r2 = jnp.where(r2 >= 0.0, r2, 0.01 * r2)
    assert jnp.allclose(p2, r2, atol=1e-5, rtol=1e-5), "multi-block mismatch"

    print("KERNEL_OK")
</pallas_src>

<mosaic_0001>
module attributes {stable_mosaic.version = 11 : i64} {
  func.func @_gap_lrelu_kernel(%arg0: i32, %arg1: i32, %arg2: memref<8x256xf32, #tpu.memory_space<vmem>>, %arg3: memref<8x1xf32, #tpu.memory_space<vmem>>, %arg4: memref<8x1xf32, #tpu.memory_space<vmem>>) attributes {dimension_semantics = [#tpu.dimension_semantics<parallel>, #tpu.dimension_semantics<arbitrary>], iteration_bounds = array<i64: 1, 1>, scalar_prefetch = 0 : i64, scratch_operands = 1 : i64, tpu.core_type = #tpu.core_type<tc>, window_params = [{transform_indices = @transform_0, window_bounds = array<i64: 8, 256>}, {transform_indices = @transform_1, window_bounds = array<i64: 8, 1>}]} {
    %c0_i32 = arith.constant 0 : i32
    %0 = arith.cmpi eq, %arg1, %c0_i32 : i32
    %1 = arith.extui %0 : i1 to i32
    %c0_i32_0 = arith.constant 0 : i32
    %2 = arith.cmpi ne, %1, %c0_i32_0 : i32
    scf.if %2 {
      %cst_8 = arith.constant 0.000000e+00 : f32
      %12 = vector.broadcast %cst_8 : f32 to vector<8x1xf32>
      %c0_9 = arith.constant 0 : index
      %c0_10 = arith.constant 0 : index
      %13 = vector.load %arg4[%c0_9, %c0_10] : memref<8x1xf32, #tpu.memory_space<vmem>>, vector<8x1xf32>
      tpu.vector_store %arg4[%c0_9, %c0_10], %12 {strides = array<i32>} : memref<8x1xf32, #tpu.memory_space<vmem>>, vector<8x1xf32>,
    } else {
    }
    %c0 = arith.constant 0 : index
    %c0_1 = arith.constant 0 : index
    %3 = vector.load %arg2[%c0, %c0_1] : memref<8x256xf32, #tpu.memory_space<vmem>>, vector<8x256xf32>
    %c0_2 = arith.constant 0 : index
    %c0_3 = arith.constant 0 : index
    %4 = vector.load %arg4[%c0_2, %c0_3] : memref<8x1xf32, #tpu.memory_space<vmem>>, vector<8x1xf32>
    %cst = arith.constant dense<0.000000e+00> : vector<8xf32>
    %5 = vector.multi_reduction <add>, %3, %cst [1] : vector<8x256xf32> to vector<8xf32>
    %6 = vector.shape_cast %5 : vector<8xf32> to vector<8x1xf32>
    %7 = arith.addf %4, %6 : vector<8x1xf32>
    %c0_4 = arith.constant 0 : index
    %c0_5 = arith.constant 0 : index
    %8 = vector.load %arg4[%c0_4, %c0_5] : memref<8x1xf32, #tpu.memory_space<vmem>>, vector<8x1xf32>
    tpu.vector_store %arg4[%c0_4, %c0_5], %7 {strides = array<i32>} : memref<8x1xf32, #tpu.memory_space<vmem>>, vector<8x1xf32>,
    %c0_i32_6 = arith.constant 0 : i32
    %9 = arith.cmpi eq, %arg1, %c0_i32_6 : i32
    %10 = arith.extui %9 : i1 to i32
    %c0_i32_7 = arith.constant 0 : i32
    %11 = arith.cmpi ne, %10, %c0_i32_7 : i32
    scf.if %11 {
      %c0_8 = arith.constant 0 : index
      %c0_9 = arith.constant 0 : index
      %12 = vector.load %arg4[%c0_8, %c0_9] : memref<8x1xf32, #tpu.memory_space<vmem>>, vector<8x1xf32>
      %cst_10 = arith.constant 3.906250e-03 : f32
      %13 = vector.broadcast %cst_10 : f32 to vector<8x1xf32>
      %14 = arith.mulf %12, %13 : vector<8x1xf32>
      %cst_11 = arith.constant 0.000000e+00 : f32
      %15 = vector.broadcast %cst_11 : f32 to vector<8x1xf32>
      %16 = arith.cmpf oge, %14, %15 : vector<8x1xf32>
      %cst_12 = arith.constant 0.00999999977 : f32
      %17 = vector.broadcast %cst_12 : f32 to vector<8x1xf32>
      %18 = arith.mulf %17, %14 : vector<8x1xf32>
      %19 = arith.select %16, %14, %18 : vector<8x1xi1>, vector<8x1xf32>
      %c0_13 = arith.constant 0 : index
      %c0_14 = arith.constant 0 : index
      %20 = vector.load %arg3[%c0_13, %c0_14] : memref<8x1xf32, #tpu.memory_space<vmem>>, vector<8x1xf32>
      tpu.vector_store %arg3[%c0_13, %c0_14], %19 {strides = array<i32>} : memref<8x1xf32, #tpu.memory_space<vmem>>, vector<8x1xf32>,
    } else {
    }
    return
  }
  func.func @transform_0(%arg0: i32, %arg1: i32) -> (i32, i32) {
    %c0_i32 = arith.constant 0 : i32
    return %arg0, %arg1 : i32, i32
  }
  func.func @transform_1(%arg0: i32, %arg1: i32) -> (i32, i32) {
    %c0_i32 = arith.constant 0 : i32
    %c0_i32_0 = arith.constant 0 : i32
    return %arg0, %c0_i32 : i32, i32
  }
}

</mosaic_0001>

<llo_original>
// kernel: tpu_custom_call.1
$region0: #{tpu_custom_call.1}
  #allocation0 [shape = 'u32[]', space=smem, size = 0x4, offset = 0x4, fixed_abs, tag = 'smem constant byte address 0x4 - core index']
  #allocation1 [shape = 'u32[144,128]{1,0:T(1,128)}', space=vmem, size = 0x12000, scoped, tag = 'internal scratch']
  #allocation2 [shape = 'f32[8,1]{1,0:T(8,128)}', space=vmem, size = 0x1000, scoped, tag = 'scratch operand']
  %s0 = inlined_call_operand.hbm [shape: f32[8,256], index: 0, kind: input, shape index: {}]
  %s1 = inlined_call_operand.vmem [shape: f32[8,1], index: 1, kind: output, shape index: {}]
  %s2 = sld [smem:[#allocation0]]
  $region26: #{tpu_custom_call.1} parent=0
    _
  %s4 = ssub.s32 1, %s2
  %s5 = scalar_select 0, %s4, %s2
  $region1: #{tpu_custom_call.1} parent=0
    #allocation3 [shape = 'u8[8192]{0}', space=vmem, size = 0x2000, scoped, tag = 'input window, operand 0, single buffered']
    #allocation4 [shape = 's32[1]{0}', space=sflag, size = 0x4, scoped, tag = 'scoped memory for tpu_custom_call.1']
    %6 = vsyncpa [#allocation4], 0
    // Predicated region
    $region2: #{tpu_custom_call.1} parent=1 // pred_check
      _
    $region3: #{tpu_custom_call.1} parent=1 // pred_check_branch
      %8 = sbr.rel (0) target = $region5
    $region4: #{tpu_custom_call.1} parent=1 // pred_region
      %s10 = ssub.s32 256, 256
      %11 = vsyncadd [#allocation4], %s10
      %s13 = sshll.u32 [#allocation3], 4
      %s14 = int_to_ptr.vmem [resolvable:$true] %s13
      %16 = dma.hbm_to_vmem [thread:$0]  %s0, 256, %s14, [#allocation4]
    $region5: #{tpu_custom_call.1} parent=1 // pred_fallthru
      _
    // Predicated region
    $region6: #{tpu_custom_call.1} parent=1 // pred_check
      _
    $region7: #{tpu_custom_call.1} parent=1 // pred_check_branch
      %18 = sbr.rel (0) target = $region9
    $region8: #{tpu_custom_call.1} parent=1 // pred_region
      %19 = dma.done [#allocation4], 256
    $region9: #{tpu_custom_call.1} parent=1 // pred_fallthru
      _
    %p20 = scmp.eq.s32.totalorder 0, 0
    // Predicated region
    $region10: #{tpu_custom_call.1} parent=1 // pred_check
      %p21 = pneg %p20
    $region11: #{tpu_custom_call.1} parent=1 // pred_check_branch
      %23 = sbr.rel (%p21) target = $region13
    $region12: #{tpu_custom_call.1} parent=1 // pred_region
      %vm24 = vcmask 7168
      %25 = vst.msk [vmem:[#allocation2] sm:$0xff] %vm24, 0.0
    $region13: #{tpu_custom_call.1} parent=1 // pred_fallthru
      _
    %v26 = vld [vmem:[#allocation3] sm:$0xff]
    %v27 = vld [vmem:[#allocation3 + $0x8] sm:$0xff]
    %v28 = vld [vmem:[#allocation2] sm:$0xff]
    %v29 = vadd.f32 %v26, %v27
    %30 = vadd.xlane.f32.xlu0 %v29
    %v31 = vpop.xlane.xlu0 %30
    %v32 = vadd.f32 %v28, %v31
    %vm33 = vcmask 7168
    %34 = vst.msk [vmem:[#allocation2] sm:$0xff] %vm33, %v32
    // Predicated region
    $region14: #{tpu_custom_call.1} parent=1 // pred_check
      %p35 = pneg %p20
    $region15: #{tpu_custom_call.1} parent=1 // pred_check_branch
      %37 = sbr.rel (%p35) target = $region17
    $region16: #{tpu_custom_call.1} parent=1 // pred_region
      %v38 = vld [vmem:[#allocation2] sm:$0xff]
      %v39 = vmul.f32 %v38, 0.00390625
      %vm40 = vcmp.ge.f32.partialorder %v39, 0.0
      %v41 = vmul.f32 %v39, 0.01
      %v42 = vsel %vm40, %v39, %v41
      %43 = vst.msk [vmem:[%s1] sm:$0xff] %vm33, %v42
    $region17: #{tpu_custom_call.1} parent=1 // pred_fallthru
      _
    // Predicated region
    $region18: #{tpu_custom_call.1} parent=1 // pred_check
      _
    $region19: #{tpu_custom_call.1} parent=1 // pred_check_branch
      %45 = sbr.rel (0) target = $region21
    $region20: #{tpu_custom_call.1} parent=1 // pred_region
      _
    $region21: #{tpu_custom_call.1} parent=1 // pred_fallthru
      _
    // Predicated region
    $region22: #{tpu_custom_call.1} parent=1 // pred_check
      _
    $region23: #{tpu_custom_call.1} parent=1 // pred_check_branch
      %47 = sbr.rel (0) target = $region25
    $region24: #{tpu_custom_call.1} parent=1 // pred_region
      _
    $region25: #{tpu_custom_call.1} parent=1 // pred_fallthru
      _
    %48 = vsyncpa [#allocation4], 1

</llo_original>
